<compile_context>
chip_gen: v6e
topology: v6e:2x2x1
jax: 0.10.0
libtpu: 0.0.40
codegen_flags: <defaults>
</compile_context>

<pallas_src>
import jax
import jax.numpy as jnp
from jax.experimental import pallas as pl
from jax.experimental.pallas import tpu as pltpu

HIDDEN1 = 768        # model1 hidden size
HIDDEN2 = 256        # model2 hidden size / resize_linear output
BN_EPS = 1e-5
TILE_B_MAX = 512     # batch tile cap (~5 MiB VMEM incl. double buffers at f32)
C_PAD = 128          # lane-dense padded classifier width


def _round_up(x, m):
    return ((x + m - 1) // m) * m


def ensemble_head_kernel(h1_ref, h2_ref,
                         w1_ref, b1_ref, s2_ref,
                         w2_ref, b2_ref,
                         out_ref):
    # GEMM 1 (bf16 x bf16 -> f32 acc): resize_linear with BN/0.5-avg folded in.
    h1 = h1_ref[...].astype(jnp.bfloat16)
    pre = jnp.dot(h1, w1_ref[...], preferred_element_type=jnp.float32)
    # Fused epilogue in f32:  + h2 * (0.5*s) + b1'
    pre = pre + h2_ref[...] * s2_ref[...] + b1_ref[...]

    # ReLU (Dropout is identity at inference)
    act = jnp.maximum(pre, 0.0)

    # GEMM 2: [tb,256](bf16) @ [256,C_PAD](bf16) + [1,C_PAD]  (lane-dense out)
    out_ref[...] = jnp.dot(act.astype(jnp.bfloat16), w2_ref[...],
                           preferred_element_type=jnp.float32) + b2_ref[...]


def fold_params(params):
    """One-time constant fold of eval-BN + 0.5 averaging, bf16 weights, padded out."""
    num_classes = int(params["w2"].shape[1])
    s = params["gamma"] * jax.lax.rsqrt(params["running_var"] + BN_EPS)   # [256]
    half_s = 0.5 * s
    w1f = (params["w1"] * half_s[None, :]).astype(jnp.bfloat16)           # [768,256] bf16
    b1f = params["b1"] * half_s - params["running_mean"] * s + params["beta"]

    c_pad = max(_round_up(num_classes, 128), C_PAD)
    w2p = (jnp.zeros((HIDDEN2, c_pad), jnp.float32)
           .at[:, :num_classes].set(params["w2"])).astype(jnp.bfloat16)
    b2p = jnp.zeros((c_pad,), jnp.float32).at[:num_classes].set(params["b2"])

    return {
        "w1f": w1f,
        "b1f": b1f.reshape(1, HIDDEN2).astype(jnp.float32),
        "s2": half_s.reshape(1, HIDDEN2).astype(jnp.float32),
        "w2": w2p,
        "b2": b2p.reshape(1, c_pad),
        "num_classes": num_classes,
        "c_pad": c_pad,
    }


def ensemble_head(last_hidden_state1, last_hidden_state2, fp, *,
                  tile_b=TILE_B_MAX, batch_semantics="parallel"):
    """last_hidden_state1: [B,S,768], last_hidden_state2: [B,S,256] -> logits [B,C].

    On v7x pass batch_semantics=pltpu.CORE_PARALLEL to split the batch grid
    explicitly across the two TensorCores.
    """
    B, S1, H1 = last_hidden_state1.shape
    _, S2, H2 = last_hidden_state2.shape
    assert H1 == HIDDEN1 and H2 == HIDDEN2
    c_pad = fp["c_pad"]

    if B % 8 == 0:
        # Fused CLS slice: free row-major reshape; column-block 0 of width H is
        # exactly token 0.  No input padding / copies.
        x1 = last_hidden_state1.reshape(B, S1 * H1)
        x2 = last_hidden_state2.reshape(B, S2 * H2)
        rows = B
        out_rows = B
        x1_bw, x2_bw = HIDDEN1, HIDDEN2
    else:
        # Fallback for ragged batch: slice CLS in the wrapper (tiny (B,H) slabs)
        # and pad only those to a multiple of 8 -- never the full (B,S,H) tensors.
        rows = _round_up(B, 8)
        x1 = jnp.pad(last_hidden_state1[:, 0, :], ((0, rows - B), (0, 0)))
        x2 = jnp.pad(last_hidden_state2[:, 0, :], ((0, rows - B), (0, 0)))
        out_rows = rows
        x1_bw, x2_bw = HIDDEN1, HIDDEN2

    # Batch tile: multiple of 8, capped at tile_b, and >=2 tiles whenever
    # rows > 8 so both v7x TensorCores get work.
    tb = max(8, min(tile_b, _round_up(pl.cdiv(rows, 2), 8)))
    n_tiles = pl.cdiv(rows, tb)

    flops = 2 * rows * (HIDDEN1 * HIDDEN2 + HIDDEN2 * c_pad)
    bytes_accessed = (rows * (HIDDEN1 + HIDDEN2) * 4                 # CLS rows (f32)
                      + (HIDDEN1 * HIDDEN2 + HIDDEN2 * c_pad) * 2    # bf16 weights
                      + (2 * HIDDEN2 + c_pad) * 4                    # biases / scale
                      + out_rows * c_pad * 4)                        # output

    out = pl.pallas_call(
        ensemble_head_kernel,
        out_shape=jax.ShapeDtypeStruct((out_rows, c_pad), jnp.float32),
        grid_spec=pltpu.PrefetchScalarGridSpec(
            num_scalar_prefetch=0,
            grid=(n_tiles,),
            in_specs=[
                pl.BlockSpec((tb, x1_bw), lambda i: (i, 0)),         # h1 (token 0)
                pl.BlockSpec((tb, x2_bw), lambda i: (i, 0)),         # h2 (token 0)
                pl.BlockSpec((HIDDEN1, HIDDEN2), lambda i: (0, 0)),  # w1' bf16 (resident)
                pl.BlockSpec((1, HIDDEN2), lambda i: (0, 0)),        # b1'
                pl.BlockSpec((1, HIDDEN2), lambda i: (0, 0)),        # 0.5*s
                pl.BlockSpec((HIDDEN2, c_pad), lambda i: (0, 0)),    # w2 bf16 (padded)
                pl.BlockSpec((1, c_pad), lambda i: (0, 0)),          # b2 (padded)
            ],
            out_specs=pl.BlockSpec((tb, c_pad), lambda i: (i, 0)),
        ),
        compiler_params=pltpu.CompilerParams(
            dimension_semantics=(batch_semantics,)),
        cost_estimate=pl.CostEstimate(flops=int(flops), transcendentals=0,
                                      bytes_accessed=int(bytes_accessed)),
    )(x1, x2, fp["w1f"], fp["b1f"], fp["s2"], fp["w2"], fp["b2"])

    return out[:B, :fp["num_classes"]]


def init_params(key, num_classes):
    k1, k2, k3, k4, k5, k6, k7, k8 = jax.random.split(key, 8)
    return {
        # nn.Linear(768, 256): stored transposed as [in, out]
        "w1": jax.random.normal(k1, (HIDDEN1, HIDDEN2), jnp.float32) * 0.02,
        "b1": jax.random.normal(k2, (HIDDEN2,), jnp.float32) * 0.02,
        # nn.Linear(256, num_classes)
        "w2": jax.random.normal(k3, (HIDDEN2, num_classes), jnp.float32) * 0.02,
        "b2": jax.random.normal(k4, (num_classes,), jnp.float32) * 0.02,
        # nn.BatchNorm1d(256) (eval mode)
        "gamma": 1.0 + 0.1 * jax.random.normal(k5, (HIDDEN2,), jnp.float32),
        "beta": 0.1 * jax.random.normal(k6, (HIDDEN2,), jnp.float32),
        "running_mean": 0.1 * jax.random.normal(k7, (HIDDEN2,), jnp.float32),
        "running_var": jnp.abs(1.0 + 0.1 * jax.random.normal(k8, (HIDDEN2,), jnp.float32)),
    }


def reference(h1, h2, p):
    # Unfolded f32 math, matching the PyTorch module exactly (eval mode).
    o1 = h1 @ p["w1"] + p["b1"]
    avg = 0.5 * (o1 + h2)
    bn = (avg - p["running_mean"]) / jnp.sqrt(p["running_var"] + BN_EPS) * p["gamma"] + p["beta"]
    act = jnp.maximum(bn, 0.0)
    return act @ p["w2"] + p["b2"]


if __name__ == "__main__":
    key = jax.random.PRNGKey(0)
    kp, kx1, kx2 = jax.random.split(key, 3)

    B, S, num_classes = 8, 8, 16
    params = init_params(kp, num_classes)

    # Synthetic sub-model outputs (last_hidden_state of model1 / model2).
    last_hidden_state1 = jax.random.normal(kx1, (B, S, HIDDEN1), jnp.float32)
    last_hidden_state2 = jax.random.normal(kx2, (B, S, HIDDEN2), jnp.float32)

    folded = fold_params(params)
    logits = ensemble_head(last_hidden_state1, last_hidden_state2, folded)
    logits = jax.block_until_ready(logits)

    ref = reference(last_hidden_state1[:, 0, :], last_hidden_state2[:, 0, :], params)
    assert logits.shape == (B, num_classes)
    # bf16 weights / activation casts with f32 accumulation -> ~1e-2 tolerance.
    assert jnp.allclose(logits, ref, atol=2e-2, rtol=2e-2), "mismatch vs reference"

    print("KERNEL_OK")
</pallas_src>

<mosaic_0001>
module attributes {stable_mosaic.version = 11 : i64} {
  func.func @ensemble_head_kernel(%arg0: i32, %arg1: memref<8x768xf32, #tpu.memory_space<vmem>>, %arg2: memref<8x256xf32, #tpu.memory_space<vmem>>, %arg3: memref<768x256xbf16, #tpu.memory_space<vmem>>, %arg4: memref<1x256xf32, #tpu.memory_space<vmem>>, %arg5: memref<1x256xf32, #tpu.memory_space<vmem>>, %arg6: memref<256x128xbf16, #tpu.memory_space<vmem>>, %arg7: memref<1x128xf32, #tpu.memory_space<vmem>>, %arg8: memref<8x128xf32, #tpu.memory_space<vmem>>) attributes {dimension_semantics = [#tpu.dimension_semantics<parallel>], iteration_bounds = array<i64: 1>, scalar_prefetch = 0 : i64, scratch_operands = 0 : i64, tpu.core_type = #tpu.core_type<tc>, window_params = [{transform_indices = @transform_0, window_bounds = array<i64: 8, 768>}, {transform_indices = @transform_1, window_bounds = array<i64: 8, 256>}, {pipeline_mode = #tpu.pipeline_mode<synchronous>, transform_indices = @transform_2, window_bounds = array<i64: 768, 256>}, {pipeline_mode = #tpu.pipeline_mode<synchronous>, transform_indices = @transform_3, window_bounds = array<i64: 1, 256>}, {pipeline_mode = #tpu.pipeline_mode<synchronous>, transform_indices = @transform_4, window_bounds = array<i64: 1, 256>}, {pipeline_mode = #tpu.pipeline_mode<synchronous>, transform_indices = @transform_5, window_bounds = array<i64: 256, 128>}, {pipeline_mode = #tpu.pipeline_mode<synchronous>, transform_indices = @transform_6, window_bounds = array<i64: 1, 128>}, {transform_indices = @transform_7, window_bounds = array<i64: 8, 128>}]} {
    %c0 = arith.constant 0 : index
    %c0_0 = arith.constant 0 : index
    %0 = vector.load %arg1[%c0, %c0_0] : memref<8x768xf32, #tpu.memory_space<vmem>>, vector<8x768xf32>
    %1 = arith.truncf %0 : vector<8x768xf32> to vector<8x768xbf16>
    %c0_1 = arith.constant 0 : index
    %c0_2 = arith.constant 0 : index
    %2 = vector.load %arg3[%c0_1, %c0_2] : memref<768x256xbf16, #tpu.memory_space<vmem>>, vector<768x256xbf16>
    %cst = arith.constant dense<0.000000e+00> : vector<8x256xf32>
    %3 = tpu.matmul %1, %2, %cst {dimension_numbers = #tpu.dot_dimension_numbers<[1], [0], [0], [1], [0, 0, 1, 1], [], []>} : vector<8x768xbf16>, vector<768x256xbf16>, vector<8x256xf32> -> vector<8x256xf32>
    %c0_3 = arith.constant 0 : index
    %c0_4 = arith.constant 0 : index
    %4 = vector.load %arg2[%c0_3, %c0_4] : memref<8x256xf32, #tpu.memory_space<vmem>>, vector<8x256xf32>
    %c0_5 = arith.constant 0 : index
    %c0_6 = arith.constant 0 : index
    %5 = vector.load %arg5[%c0_5, %c0_6] : memref<1x256xf32, #tpu.memory_space<vmem>>, vector<1x256xf32>
    %6 = vector.broadcast %5 : vector<1x256xf32> to vector<8x256xf32>
    %7 = arith.mulf %4, %6 : vector<8x256xf32>
    %8 = arith.addf %3, %7 : vector<8x256xf32>
    %c0_7 = arith.constant 0 : index
    %c0_8 = arith.constant 0 : index
    %9 = vector.load %arg4[%c0_7, %c0_8] : memref<1x256xf32, #tpu.memory_space<vmem>>, vector<1x256xf32>
    %10 = vector.broadcast %9 : vector<1x256xf32> to vector<8x256xf32>
    %11 = arith.addf %8, %10 : vector<8x256xf32>
    %cst_9 = arith.constant 0.000000e+00 : f32
    %12 = vector.broadcast %cst_9 : f32 to vector<8x256xf32>
    %13 = arith.maximumf %11, %12 : vector<8x256xf32>
    %14 = arith.truncf %13 : vector<8x256xf32> to vector<8x256xbf16>
    %c0_10 = arith.constant 0 : index
    %c0_11 = arith.constant 0 : index
    %15 = vector.load %arg6[%c0_10, %c0_11] : memref<256x128xbf16, #tpu.memory_space<vmem>>, vector<256x128xbf16>
    %cst_12 = arith.constant dense<0.000000e+00> : vector<8x128xf32>
    %16 = tpu.matmul %14, %15, %cst_12 {dimension_numbers = #tpu.dot_dimension_numbers<[1], [0], [0], [1], [0, 0, 1, 1], [], []>} : vector<8x256xbf16>, vector<256x128xbf16>, vector<8x128xf32> -> vector<8x128xf32>
    %c0_13 = arith.constant 0 : index
    %c0_14 = arith.constant 0 : index
    %17 = vector.load %arg7[%c0_13, %c0_14] : memref<1x128xf32, #tpu.memory_space<vmem>>, vector<1x128xf32>
    %18 = vector.broadcast %17 : vector<1x128xf32> to vector<8x128xf32>
    %19 = arith.addf %16, %18 : vector<8x128xf32>
    %c0_15 = arith.constant 0 : index
    %c0_16 = arith.constant 0 : index
    %20 = vector.load %arg8[%c0_15, %c0_16] : memref<8x128xf32, #tpu.memory_space<vmem>>, vector<8x128xf32>
    tpu.vector_store %arg8[%c0_15, %c0_16], %19 {strides = array<i32>} : memref<8x128xf32, #tpu.memory_space<vmem>>, vector<8x128xf32>,
    return
  }
  func.func @transform_0(%arg0: i32) -> (i32, i32) {
    %c0_i32 = arith.constant 0 : i32
    %c0_i32_0 = arith.constant 0 : i32
    return %arg0, %c0_i32 : i32, i32
  }
  func.func @transform_1(%arg0: i32) -> (i32, i32) {
    %c0_i32 = arith.constant 0 : i32
    %c0_i32_0 = arith.constant 0 : i32
    return %arg0, %c0_i32 : i32, i32
  }
  func.func @transform_2(%arg0: i32) -> (i32, i32) {
    %c0_i32 = arith.constant 0 : i32
    %c0_i32_0 = arith.constant 0 : i32
    %c0_i32_1 = arith.constant 0 : i32
    return %c0_i32, %c0_i32_0 : i32, i32
  }
  func.func @transform_3(%arg0: i32) -> (i32, i32) {
    %c0_i32 = arith.constant 0 : i32
    %c0_i32_0 = arith.constant 0 : i32
    %c0_i32_1 = arith.constant 0 : i32
    return %c0_i32, %c0_i32_0 : i32, i32
  }
  func.func @transform_4(%arg0: i32) -> (i32, i32) {
    %c0_i32 = arith.constant 0 : i32
    %c0_i32_0 = arith.constant 0 : i32
    %c0_i32_1 = arith.constant 0 : i32
    return %c0_i32, %c0_i32_0 : i32, i32
  }
  func.func @transform_5(%arg0: i32) -> (i32, i32) {
    %c0_i32 = arith.constant 0 : i32
    %c0_i32_0 = arith.constant 0 : i32
    %c0_i32_1 = arith.constant 0 : i32
    return %c0_i32, %c0_i32_0 : i32, i32
  }
  func.func @transform_6(%arg0: i32) -> (i32, i32) {
    %c0_i32 = arith.constant 0 : i32
    %c0_i32_0 = arith.constant 0 : i32
    %c0_i32_1 = arith.constant 0 : i32
    return %c0_i32, %c0_i32_0 : i32, i32
  }
  func.func @transform_7(%arg0: i32) -> (i32, i32) {
    %c0_i32 = arith.constant 0 : i32
    %c0_i32_0 = arith.constant 0 : i32
    return %arg0, %c0_i32 : i32, i32
  }
}

</mosaic_0001>

<llo_original>
// kernel: tpu_custom_call.1
$region0: #{tpu_custom_call.1}
  #allocation0 [shape = 'u32[]', space=smem, size = 0x4, offset = 0x4, fixed_abs, tag = 'smem constant byte address 0x4 - core index']
  #allocation1 [shape = 'u32[144,128]{1,0:T(1,128)}', space=vmem, size = 0x12000, scoped, tag = 'internal scratch']
  %s0 = inlined_call_operand.hbm [shape: f32[8,6144], index: 0, kind: input, shape index: {}]
  %s1 = inlined_call_operand.hbm [shape: f32[8,2048], index: 1, kind: input, shape index: {}]
  %s2 = inlined_call_operand.hbm [shape: bf16[768,256], index: 2, kind: input, shape index: {}]
  %s3 = inlined_call_operand.vmem [shape: f32[1,256], index: 3, kind: input, shape index: {}]
  %s4 = inlined_call_operand.vmem [shape: f32[1,256], index: 4, kind: input, shape index: {}]
  %s5 = inlined_call_operand.hbm [shape: bf16[256,128], index: 5, kind: input, shape index: {}]
  %s6 = inlined_call_operand.vmem [shape: f32[1,128], index: 6, kind: input, shape index: {}]
  %s7 = inlined_call_operand.hbm [shape: f32[8,128], index: 7, kind: output, shape index: {}]
  %s8 = sld [smem:[#allocation0]]
  $region54: #{tpu_custom_call.1} parent=0
    _
  %s10 = ssub.s32 1, %s8
  %s11 = scalar_select 0, %s10, %s8
  $region1: #{tpu_custom_call.1} parent=0
    #allocation2 [shape = 'u8[24576]{0}', space=vmem, size = 0x6000, scoped, tag = 'input window, operand 0, single buffered']
    #allocation3 [shape = 's32[1]{0}', space=sflag, size = 0x4, scoped, tag = 'scoped memory for tpu_custom_call.1']
    #allocation4 [shape = 's32[1]{0}', space=sflag, size = 0x4, scoped, tag = 'scoped memory for tpu_custom_call.1']
    #allocation5 [shape = 'u8[8192]{0}', space=vmem, size = 0x2000, scoped, tag = 'input window, operand 1, single buffered']
    #allocation6 [shape = 's32[1]{0}', space=sflag, size = 0x4, scoped, tag = 'scoped memory for tpu_custom_call.1']
    #allocation7 [shape = 'u8[393216]{0}', space=vmem, size = 0x60000, scoped, tag = 'input window, operand 2, single buffered']
    #allocation8 [shape = 'u8[65536]{0}', space=vmem, size = 0x10000, scoped, tag = 'input window, operand 5, single buffered']
    #allocation9 [shape = 's32[1]{0}', space=sflag, size = 0x4, scoped, tag = 'scoped memory for tpu_custom_call.1']
    #allocation10 [shape = 'u8[4096]{0}', space=vmem, size = 0x1000, scoped, tag = 'output window, operand 0, single buffered']
    %12 = vsyncpa [#allocation3], 0
    %13 = vsyncpa [#allocation6], 0
    %14 = vsyncpa [#allocation9], 0
    %15 = vsyncpa [#allocation4], 0
    // Predicated region
    $region2: #{tpu_custom_call.1} parent=1 // pred_check
      _
    $region3: #{tpu_custom_call.1} parent=1 // pred_check_branch
      %17 = sbr.rel (0) target = $region5
    $region4: #{tpu_custom_call.1} parent=1 // pred_region
      %s19 = ssub.s32 768, 768
      %20 = vsyncadd [#allocation3], %s19
      %s22 = sshll.u32 [#allocation2], 4
      %s23 = int_to_ptr.vmem [resolvable:$true] %s22
      %25 = dma.hbm_to_vmem [thread:$0]  %s0, 768, %s23, [#allocation3]
    $region5: #{tpu_custom_call.1} parent=1 // pred_fallthru
      _
    // Predicated region
    $region6: #{tpu_custom_call.1} parent=1 // pred_check
      _
    $region7: #{tpu_custom_call.1} parent=1 // pred_check_branch
      %27 = sbr.rel (0) target = $region9
    $region8: #{tpu_custom_call.1} parent=1 // pred_region
      %s29 = ssub.s32 256, 256
      %30 = vsyncadd [#allocation6], %s29
      %s32 = sshll.u32 [#allocation5], 4
      %s33 = int_to_ptr.vmem [resolvable:$true] %s32
      %35 = dma.hbm_to_vmem [thread:$0]  %s1, 256, %s33, [#allocation6]
    $region9: #{tpu_custom_call.1} parent=1 // pred_fallthru
      _
    // Predicated region
    $region10: #{tpu_custom_call.1} parent=1 // pred_check
      _
    $region11: #{tpu_custom_call.1} parent=1 // pred_check_branch
      %37 = sbr.rel (0) target = $region13
    $region12: #{tpu_custom_call.1} parent=1 // pred_region
      %s39 = ssub.s32 12288, 12288
      %40 = vsyncadd [#allocation6], %s39
      %s41 = sshll.u32 [#allocation7], 4
      %s42 = int_to_ptr.vmem [resolvable:$true] %s41
      %47 = dma.hbm_to_vmem [thread:$0]  %s2, 12288, %s42, [#allocation6], 128, 128, 8
    $region13: #{tpu_custom_call.1} parent=1 // pred_fallthru
      _
    // Predicated region
    $region14: #{tpu_custom_call.1} parent=1 // pred_check
      _
    $region15: #{tpu_custom_call.1} parent=1 // pred_check_branch
      %49 = sbr.rel (0) target = $region17
    $region16: #{tpu_custom_call.1} parent=1 // pred_region
      _
    $region17: #{tpu_custom_call.1} parent=1 // pred_fallthru
      _
    // Predicated region
    $region18: #{tpu_custom_call.1} parent=1 // pred_check
      _
    $region19: #{tpu_custom_call.1} parent=1 // pred_check_branch
      %51 = sbr.rel (0) target = $region21
    $region20: #{tpu_custom_call.1} parent=1 // pred_region
      _
    $region21: #{tpu_custom_call.1} parent=1 // pred_fallthru
      _
    // Predicated region
    $region22: #{tpu_custom_call.1} parent=1 // pred_check
      _
    $region23: #{tpu_custom_call.1} parent=1 // pred_check_branch
      %53 = sbr.rel (0) target = $region25
    $region24: #{tpu_custom_call.1} parent=1 // pred_region
      %s55 = ssub.s32 2048, 2048
      %56 = vsyncadd [#allocation9], %s55
      %s57 = sshll.u32 [#allocation8], 4
      %s58 = int_to_ptr.vmem [resolvable:$true] %s57
      %63 = dma.hbm_to_vmem [thread:$0]  %s5, 2048, %s58, [#allocation9], 64, 64, 4
    $region25: #{tpu_custom_call.1} parent=1 // pred_fallthru
      _
    // Predicated region
    $region26: #{tpu_custom_call.1} parent=1 // pred_check
      _
    $region27: #{tpu_custom_call.1} parent=1 // pred_check_branch
      %65 = sbr.rel (0) target = $region29
    $region28: #{tpu_custom_call.1} parent=1 // pred_region
      _
    $region29: #{tpu_custom_call.1} parent=1 // pred_fallthru
      _
    // Predicated region
    $region30: #{tpu_custom_call.1} parent=1 // pred_check
      _
    $region31: #{tpu_custom_call.1} parent=1 // pred_check_branch
      %67 = sbr.rel (0) target = $region33
    $region32: #{tpu_custom_call.1} parent=1 // pred_region
      %68 = dma.done [#allocation3], 768
    $region33: #{tpu_custom_call.1} parent=1 // pred_fallthru
      _
    // Predicated region
    $region34: #{tpu_custom_call.1} parent=1 // pred_check
      _
    $region35: #{tpu_custom_call.1} parent=1 // pred_check_branch
      %70 = sbr.rel (0) target = $region37
    $region36: #{tpu_custom_call.1} parent=1 // pred_region
      %71 = dma.done [#allocation6], 256
    $region37: #{tpu_custom_call.1} parent=1 // pred_fallthru
      _
    // Predicated region
    $region38: #{tpu_custom_call.1} parent=1 // pred_check
      _
    $region39: #{tpu_custom_call.1} parent=1 // pred_check_branch
      %73 = sbr.rel (0) target = $region41
    $region40: #{tpu_custom_call.1} parent=1 // pred_region
      %74 = dma.done [#allocation6], 12288
    $region41: #{tpu_custom_call.1} parent=1 // pred_fallthru
      _
    // Predicated region
    $region42: #{tpu_custom_call.1} parent=1 // pred_check
      _
    $region43: #{tpu_custom_call.1} parent=1 // pred_check_branch
      %76 = sbr.rel (0) target = $region45
    $region44: #{tpu_custom_call.1} parent=1 // pred_region
      %77 = dma.done [#allocation9], 2048
    $region45: #{tpu_custom_call.1} parent=1 // pred_fallthru
      _
    %v79 = vld [vmem:[#allocation2] sm:$0xff]
    %v80 = vld [vmem:[#allocation2 + $0x8] sm:$0xff]
    %v81 = vld [vmem:[#allocation2 + $0x10] sm:$0xff]
    %v82 = vld [vmem:[#allocation2 + $0x18] sm:$0xff]
    %v83 = vld [vmem:[#allocation2 + $0x20] sm:$0xff]
    %v84 = vld [vmem:[#allocation2 + $0x28] sm:$0xff]
    %v85 = vpack.c.bf16 %v79, %v79
    %v86 = vpack.c.bf16 %v80, %v80
    %v87 = vpack.c.bf16 %v81, %v81
    %v88 = vpack.c.bf16 %v82, %v82
    %v89 = vpack.c.bf16 %v83, %v83
    %v90 = vpack.c.bf16 %v84, %v84
    %v91 = vld [vmem:[#allocation7] sm:$0xff]
    %v92 = vld [vmem:[#allocation7 + $0x8] sm:$0xff]
    %v93 = vld [vmem:[#allocation7 + $0x10] sm:$0xff]
    %v94 = vld [vmem:[#allocation7 + $0x18] sm:$0xff]
    %v95 = vld [vmem:[#allocation7 + $0x20] sm:$0xff]
    %v96 = vld [vmem:[#allocation7 + $0x28] sm:$0xff]
    %v97 = vld [vmem:[#allocation7 + $0x30] sm:$0xff]
    %v98 = vld [vmem:[#allocation7 + $0x38] sm:$0xff]
    %v99 = vld [vmem:[#allocation7 + $0x40] sm:$0xff]
    %v100 = vld [vmem:[#allocation7 + $0x48] sm:$0xff]
    %v101 = vld [vmem:[#allocation7 + $0x50] sm:$0xff]
    %v102 = vld [vmem:[#allocation7 + $0x58] sm:$0xff]
    %v103 = vld [vmem:[#allocation7 + $0x60] sm:$0xff]
    %v104 = vld [vmem:[#allocation7 + $0x68] sm:$0xff]
    %v105 = vld [vmem:[#allocation7 + $0x70] sm:$0xff]
    %v106 = vld [vmem:[#allocation7 + $0x78] sm:$0xff]
    %v107 = vld [vmem:[#allocation7 + $0x80] sm:$0xff]
    %v108 = vld [vmem:[#allocation7 + $0x88] sm:$0xff]
    %v109 = vld [vmem:[#allocation7 + $0x90] sm:$0xff]
    %v110 = vld [vmem:[#allocation7 + $0x98] sm:$0xff]
    %v111 = vld [vmem:[#allocation7 + $0xa0] sm:$0xff]
    %v112 = vld [vmem:[#allocation7 + $0xa8] sm:$0xff]
    %v113 = vld [vmem:[#allocation7 + $0xb0] sm:$0xff]
    %v114 = vld [vmem:[#allocation7 + $0xb8] sm:$0xff]
    %v115 = vld [vmem:[#allocation7 + $0xc0] sm:$0xff]
    %v116 = vld [vmem:[#allocation7 + $0xc8] sm:$0xff]
    %v117 = vld [vmem:[#allocation7 + $0xd0] sm:$0xff]
    %v118 = vld [vmem:[#allocation7 + $0xd8] sm:$0xff]
    %v119 = vld [vmem:[#allocation7 + $0xe0] sm:$0xff]
    %v120 = vld [vmem:[#allocation7 + $0xe8] sm:$0xff]
    %v121 = vld [vmem:[#allocation7 + $0xf0] sm:$0xff]
    %v122 = vld [vmem:[#allocation7 + $0xf8] sm:$0xff]
    %v123 = vld [vmem:[#allocation7 + $0x100] sm:$0xff]
    %v124 = vld [vmem:[#allocation7 + $0x108] sm:$0xff]
    %v125 = vld [vmem:[#allocation7 + $0x110] sm:$0xff]
    %v126 = vld [vmem:[#allocation7 + $0x118] sm:$0xff]
    %v127 = vld [vmem:[#allocation7 + $0x120] sm:$0xff]
    %v128 = vld [vmem:[#allocation7 + $0x128] sm:$0xff]
    %v129 = vld [vmem:[#allocation7 + $0x130] sm:$0xff]
    %v130 = vld [vmem:[#allocation7 + $0x138] sm:$0xff]
    %v131 = vld [vmem:[#allocation7 + $0x140] sm:$0xff]
    %v132 = vld [vmem:[#allocation7 + $0x148] sm:$0xff]
    %v133 = vld [vmem:[#allocation7 + $0x150] sm:$0xff]
    %v134 = vld [vmem:[#allocation7 + $0x158] sm:$0xff]
    %v135 = vld [vmem:[#allocation7 + $0x160] sm:$0xff]
    %v136 = vld [vmem:[#allocation7 + $0x168] sm:$0xff]
    %v137 = vld [vmem:[#allocation7 + $0x170] sm:$0xff]
    %v138 = vld [vmem:[#allocation7 + $0x178] sm:$0xff]
    %v139 = vld [vmem:[#allocation7 + $0x180] sm:$0xff]
    %v140 = vld [vmem:[#allocation7 + $0x188] sm:$0xff]
    %v141 = vld [vmem:[#allocation7 + $0x190] sm:$0xff]
    %v142 = vld [vmem:[#allocation7 + $0x198] sm:$0xff]
    %v143 = vld [vmem:[#allocation7 + $0x1a0] sm:$0xff]
    %v144 = vld [vmem:[#allocation7 + $0x1a8] sm:$0xff]
    %v145 = vld [vmem:[#allocation7 + $0x1b0] sm:$0xff]
    %v146 = vld [vmem:[#allocation7 + $0x1b8] sm:$0xff]
    %v147 = vld [vmem:[#allocation7 + $0x1c0] sm:$0xff]
    %v148 = vld [vmem:[#allocation7 + $0x1c8] sm:$0xff]
    %v149 = vld [vmem:[#allocation7 + $0x1d0] sm:$0xff]
    %v150 = vld [vmem:[#allocation7 + $0x1d8] sm:$0xff]
    %v151 = vld [vmem:[#allocation7 + $0x1e0] sm:$0xff]
    %v152 = vld [vmem:[#allocation7 + $0x1e8] sm:$0xff]
    %v153 = vld [vmem:[#allocation7 + $0x1f0] sm:$0xff]
    %v154 = vld [vmem:[#allocation7 + $0x1f8] sm:$0xff]
    %v155 = vld [vmem:[#allocation7 + $0x200] sm:$0xff]
    %v156 = vld [vmem:[#allocation7 + $0x208] sm:$0xff]
    %v157 = vld [vmem:[#allocation7 + $0x210] sm:$0xff]
    %v158 = vld [vmem:[#allocation7 + $0x218] sm:$0xff]
    %v159 = vld [vmem:[#allocation7 + $0x220] sm:$0xff]
    %v160 = vld [vmem:[#allocation7 + $0x228] sm:$0xff]
    %v161 = vld [vmem:[#allocation7 + $0x230] sm:$0xff]
    %v162 = vld [vmem:[#allocation7 + $0x238] sm:$0xff]
    %v163 = vld [vmem:[#allocation7 + $0x240] sm:$0xff]
    %v164 = vld [vmem:[#allocation7 + $0x248] sm:$0xff]
    %v165 = vld [vmem:[#allocation7 + $0x250] sm:$0xff]
    %v166 = vld [vmem:[#allocation7 + $0x258] sm:$0xff]
    %v167 = vld [vmem:[#allocation7 + $0x260] sm:$0xff]
    %v168 = vld [vmem:[#allocation7 + $0x268] sm:$0xff]
    %v169 = vld [vmem:[#allocation7 + $0x270] sm:$0xff]
    %v170 = vld [vmem:[#allocation7 + $0x278] sm:$0xff]
    %v171 = vld [vmem:[#allocation7 + $0x280] sm:$0xff]
    %v172 = vld [vmem:[#allocation7 + $0x288] sm:$0xff]
    %v173 = vld [vmem:[#allocation7 + $0x290] sm:$0xff]
    %v174 = vld [vmem:[#allocation7 + $0x298] sm:$0xff]
    %v175 = vld [vmem:[#allocation7 + $0x2a0] sm:$0xff]
    %v176 = vld [vmem:[#allocation7 + $0x2a8] sm:$0xff]
    %v177 = vld [vmem:[#allocation7 + $0x2b0] sm:$0xff]
    %v178 = vld [vmem:[#allocation7 + $0x2b8] sm:$0xff]
    %v179 = vld [vmem:[#allocation7 + $0x2c0] sm:$0xff]
    %v180 = vld [vmem:[#allocation7 + $0x2c8] sm:$0xff]
    %v181 = vld [vmem:[#allocation7 + $0x2d0] sm:$0xff]
    %v182 = vld [vmem:[#allocation7 + $0x2d8] sm:$0xff]
    %v183 = vld [vmem:[#allocation7 + $0x2e0] sm:$0xff]
    %v184 = vld [vmem:[#allocation7 + $0x2e8] sm:$0xff]
    %v185 = vld [vmem:[#allocation7 + $0x2f0] sm:$0xff]
    %v186 = vld [vmem:[#allocation7 + $0x2f8] sm:$0xff]
    %v187 = vld [vmem:[#allocation5] sm:$0xff]
    %v188 = vld [vmem:[#allocation5 + $0x8] sm:$0xff]
    %v189 = vld [vmem:[%s4] sm:$0x3]
    %v191 = vlaneseq
    %v192 = vshrl.u32 %v191, 7
    %v193 = vsub.s32 0, %v192
    %v194 = vrot.slane %v189, %v193
    %v195 = vlaneseq
    %v196 = vshrl.u32 %v195, 7
    %v197 = vsub.s32 1, %v196
    %v198 = vrot.slane %v189, %v197
    %v201 = vmul.f32 %v187, %v194
    %v202 = vmul.f32 %v188, %v198
    %v299 = vunpack.c.l.b16 %v91
    %v300 = vunpack.c.h.b16 %v91
    %v301 = vunpack.c.l.b16 %v92
    %v302 = vunpack.c.h.b16 %v92
    %v303 = vunpack.c.l.b16 %v93
    %v304 = vunpack.c.h.b16 %v93
    %v305 = vunpack.c.l.b16 %v94
    %v306 = vunpack.c.h.b16 %v94
    %v307 = vunpack.c.l.b16 %v95
    %v308 = vunpack.c.h.b16 %v95
    %v309 = vunpack.c.l.b16 %v96
    %v310 = vunpack.c.h.b16 %v96
    %v311 = vunpack.c.l.b16 %v97
    %v312 = vunpack.c.h.b16 %v97
    %v313 = vunpack.c.l.b16 %v98
    %v314 = vunpack.c.h.b16 %v98
    %v315 = vunpack.c.l.b16 %v99
    %v316 = vunpack.c.h.b16 %v99
    %v317 = vunpack.c.l.b16 %v100
    %v318 = vunpack.c.h.b16 %v100
    %v319 = vunpack.c.l.b16 %v101
    %v320 = vunpack.c.h.b16 %v101
    %v321 = vunpack.c.l.b16 %v102
    %v322 = vunpack.c.h.b16 %v102
    %v323 = vunpack.c.l.b16 %v103
    %v324 = vunpack.c.h.b16 %v103
    %v325 = vunpack.c.l.b16 %v104
    %v326 = vunpack.c.h.b16 %v104
    %v327 = vunpack.c.l.b16 %v105
    %v328 = vunpack.c.h.b16 %v105
    %v329 = vunpack.c.l.b16 %v106
    %v330 = vunpack.c.h.b16 %v106
    %v331 = vunpack.c.l.b16 %v107
    %v332 = vunpack.c.h.b16 %v107
    %v333 = vunpack.c.l.b16 %v108
    %v334 = vunpack.c.h.b16 %v108
    %v335 = vunpack.c.l.b16 %v109
    %v336 = vunpack.c.h.b16 %v109
    %v337 = vunpack.c.l.b16 %v110
    %v338 = vunpack.c.h.b16 %v110
    %v339 = vunpack.c.l.b16 %v111
    %v340 = vunpack.c.h.b16 %v111
    %v341 = vunpack.c.l.b16 %v112
    %v342 = vunpack.c.h.b16 %v112
    %v343 = vunpack.c.l.b16 %v113
    %v344 = vunpack.c.h.b16 %v113
    %v345 = vunpack.c.l.b16 %v114
    %v346 = vunpack.c.h.b16 %v114
    %v347 = vunpack.c.l.b16 %v115
    %v348 = vunpack.c.h.b16 %v115
    %v349 = vunpack.c.l.b16 %v116
    %v350 = vunpack.c.h.b16 %v116
    %v351 = vunpack.c.l.b16 %v117
    %v352 = vunpack.c.h.b16 %v117
    %v353 = vunpack.c.l.b16 %v118
    %v354 = vunpack.c.h.b16 %v118
    %v355 = vunpack.c.l.b16 %v119
    %v356 = vunpack.c.h.b16 %v119
    %v357 = vunpack.c.l.b16 %v120
    %v358 = vunpack.c.h.b16 %v120
    %v359 = vunpack.c.l.b16 %v121
    %v360 = vunpack.c.h.b16 %v121
    %v361 = vunpack.c.l.b16 %v122
    %v362 = vunpack.c.h.b16 %v122
    %v363 = vunpack.c.l.b16 %v123
    %v364 = vunpack.c.h.b16 %v123
    %v365 = vunpack.c.l.b16 %v124
    %v366 = vunpack.c.h.b16 %v124
    %v367 = vunpack.c.l.b16 %v125
    %v368 = vunpack.c.h.b16 %v125
    %v369 = vunpack.c.l.b16 %v126
    %v370 = vunpack.c.h.b16 %v126
    %v371 = vunpack.c.l.b16 %v127
    %v372 = vunpack.c.h.b16 %v127
    %v373 = vunpack.c.l.b16 %v128
    %v374 = vunpack.c.h.b16 %v128
    %v375 = vunpack.c.l.b16 %v129
    %v376 = vunpack.c.h.b16 %v129
    %v377 = vunpack.c.l.b16 %v130
    %v378 = vunpack.c.h.b16 %v130
    %v379 = vunpack.c.l.b16 %v131
    %v380 = vunpack.c.h.b16 %v131
    %v381 = vunpack.c.l.b16 %v132
    %v382 = vunpack.c.h.b16 %v132
    %v383 = vunpack.c.l.b16 %v133
    %v384 = vunpack.c.h.b16 %v133
    %v385 = vunpack.c.l.b16 %v134
    %v386 = vunpack.c.h.b16 %v134
    %v387 = vunpack.c.l.b16 %v135
    %v388 = vunpack.c.h.b16 %v135
    %v389 = vunpack.c.l.b16 %v136
    %v390 = vunpack.c.h.b16 %v136
    %v391 = vunpack.c.l.b16 %v137
    %v392 = vunpack.c.h.b16 %v137
    %v393 = vunpack.c.l.b16 %v138
    %v394 = vunpack.c.h.b16 %v138
    %v395 = vunpack.c.l.b16 %v139
    %v396 = vunpack.c.h.b16 %v139
    %v397 = vunpack.c.l.b16 %v140
    %v398 = vunpack.c.h.b16 %v140
    %v399 = vunpack.c.l.b16 %v141
    %v400 = vunpack.c.h.b16 %v141
    %v401 = vunpack.c.l.b16 %v142
    %v402 = vunpack.c.h.b16 %v142
    %v403 = vunpack.c.l.b16 %v143
    %v404 = vunpack.c.h.b16 %v143
    %v405 = vunpack.c.l.b16 %v144
    %v406 = vunpack.c.h.b16 %v144
    %v407 = vunpack.c.l.b16 %v145
    %v408 = vunpack.c.h.b16 %v145
    %v409 = vunpack.c.l.b16 %v146
    %v410 = vunpack.c.h.b16 %v146
    %v411 = vunpack.c.l.b16 %v147
    %v412 = vunpack.c.h.b16 %v147
    %v413 = vunpack.c.l.b16 %v148
    %v414 = vunpack.c.h.b16 %v148
    %v415 = vunpack.c.l.b16 %v149
    %v416 = vunpack.c.h.b16 %v149
    %v417 = vunpack.c.l.b16 %v150
    %v418 = vunpack.c.h.b16 %v150
    %v419 = vunpack.c.l.b16 %v151
    %v420 = vunpack.c.h.b16 %v151
    %v421 = vunpack.c.l.b16 %v152
    %v422 = vunpack.c.h.b16 %v152
    %v423 = vunpack.c.l.b16 %v153
    %v424 = vunpack.c.h.b16 %v153
    %v425 = vunpack.c.l.b16 %v154
    %v426 = vunpack.c.h.b16 %v154
    %v427 = vunpack.c.l.b16 %v155
    %v428 = vunpack.c.h.b16 %v155
    %v429 = vunpack.c.l.b16 %v156
    %v430 = vunpack.c.h.b16 %v156
    %v431 = vunpack.c.l.b16 %v157
    %v432 = vunpack.c.h.b16 %v157
    %v433 = vunpack.c.l.b16 %v158
    %v434 = vunpack.c.h.b16 %v158
    %v435 = vunpack.c.l.b16 %v159
    %v436 = vunpack.c.h.b16 %v159
    %v437 = vunpack.c.l.b16 %v160
    %v438 = vunpack.c.h.b16 %v160
    %v439 = vunpack.c.l.b16 %v161
    %v440 = vunpack.c.h.b16 %v161
    %v441 = vunpack.c.l.b16 %v162
    %v442 = vunpack.c.h.b16 %v162
    %v443 = vunpack.c.l.b16 %v163
    %v444 = vunpack.c.h.b16 %v163
    %v445 = vunpack.c.l.b16 %v164
    %v446 = vunpack.c.h.b16 %v164
    %v447 = vunpack.c.l.b16 %v165
    %v448 = vunpack.c.h.b16 %v165
    %v449 = vunpack.c.l.b16 %v166
    %v450 = vunpack.c.h.b16 %v166
    %v451 = vunpack.c.l.b16 %v167
    %v452 = vunpack.c.h.b16 %v167
    %v453 = vunpack.c.l.b16 %v168
    %v454 = vunpack.c.h.b16 %v168
    %v455 = vunpack.c.l.b16 %v169
    %v456 = vunpack.c.h.b16 %v169
    %v457 = vunpack.c.l.b16 %v170
    %v458 = vunpack.c.h.b16 %v170
    %v459 = vunpack.c.l.b16 %v171
    %v460 = vunpack.c.h.b16 %v171
    %v461 = vunpack.c.l.b16 %v172
    %v462 = vunpack.c.h.b16 %v172
    %v463 = vunpack.c.l.b16 %v173
    %v464 = vunpack.c.h.b16 %v173
    %v465 = vunpack.c.l.b16 %v174
    %v466 = vunpack.c.h.b16 %v174
    %v467 = vunpack.c.l.b16 %v175
    %v468 = vunpack.c.h.b16 %v175
    %v469 = vunpack.c.l.b16 %v176
    %v470 = vunpack.c.h.b16 %v176
    %v471 = vunpack.c.l.b16 %v177
    %v472 = vunpack.c.h.b16 %v177
    %v473 = vunpack.c.l.b16 %v178
    %v474 = vunpack.c.h.b16 %v178
    %v475 = vunpack.c.l.b16 %v179
    %v476 = vunpack.c.h.b16 %v179
    %v477 = vunpack.c.l.b16 %v180
    %v478 = vunpack.c.h.b16 %v180
    %v479 = vunpack.c.l.b16 %v181
    %v480 = vunpack.c.h.b16 %v181
    %v481 = vunpack.c.l.b16 %v182
    %v482 = vunpack.c.h.b16 %v182
    %v483 = vunpack.c.l.b16 %v183
    %v484 = vunpack.c.h.b16 %v183
    %v485 = vunpack.c.l.b16 %v184
    %v486 = vunpack.c.h.b16 %v184
    %v487 = vunpack.c.l.b16 %v185
    %v488 = vunpack.c.h.b16 %v185
    %v489 = vunpack.c.l.b16 %v186
    %v490 = vunpack.c.h.b16 %v186
    %v491 = vpack.c.b16 %v301, %v299
    %v492 = vpack.c.b16 %v302, %v300
    %v493 = vpack.c.b16 %v305, %v303
    %v494 = vpack.c.b16 %v306, %v304
    %v495 = vpack.c.b16 %v309, %v307
    %v496 = vpack.c.b16 %v310, %v308
    %v497 = vpack.c.b16 %v313, %v311
    %v498 = vpack.c.b16 %v314, %v312
    %v499 = vpack.c.b16 %v317, %v315
    %v500 = vpack.c.b16 %v318, %v316
    %v501 = vpack.c.b16 %v321, %v319
    %v502 = vpack.c.b16 %v322, %v320
    %v503 = vpack.c.b16 %v325, %v323
    %v504 = vpack.c.b16 %v326, %v324
    %v505 = vpack.c.b16 %v329, %v327
    %v506 = vpack.c.b16 %v330, %v328
    %v507 = vpack.c.b16 %v333, %v331
    %v508 = vpack.c.b16 %v334, %v332
    %v509 = vpack.c.b16 %v337, %v335
    %v510 = vpack.c.b16 %v338, %v336
    %v511 = vpack.c.b16 %v341, %v339
    %v512 = vpack.c.b16 %v342, %v340
    %v513 = vpack.c.b16 %v345, %v343
    %v514 = vpack.c.b16 %v346, %v344
    %v515 = vpack.c.b16 %v349, %v347
    %v516 = vpack.c.b16 %v350, %v348
    %v517 = vpack.c.b16 %v353, %v351
    %v518 = vpack.c.b16 %v354, %v352
    %v519 = vpack.c.b16 %v357, %v355
    %v520 = vpack.c.b16 %v358, %v356
    %v521 = vpack.c.b16 %v361, %v359
    %v522 = vpack.c.b16 %v362, %v360
    %v523 = vpack.c.b16 %v365, %v363
    %v524 = vpack.c.b16 %v366, %v364
    %v525 = vpack.c.b16 %v369, %v367
    %v526 = vpack.c.b16 %v370, %v368
    %v527 = vpack.c.b16 %v373, %v371
    %v528 = vpack.c.b16 %v374, %v372
    %v529 = vpack.c.b16 %v377, %v375
    %v530 = vpack.c.b16 %v378, %v376
    %v531 = vpack.c.b16 %v381, %v379
    %v532 = vpack.c.b16 %v382, %v380
    %v533 = vpack.c.b16 %v385, %v383
    %v534 = vpack.c.b16 %v386, %v384
    %v535 = vpack.c.b16 %v389, %v387
    %v536 = vpack.c.b16 %v390, %v388
    %v537 = vpack.c.b16 %v393, %v391
    %v538 = vpack.c.b16 %v394, %v392
    %v539 = vpack.c.b16 %v397, %v395
    %v540 = vpack.c.b16 %v398, %v396
    %v541 = vpack.c.b16 %v401, %v399
    %v542 = vpack.c.b16 %v402, %v400
    %v543 = vpack.c.b16 %v405, %v403
    %v544 = vpack.c.b16 %v406, %v404
    %v545 = vpack.c.b16 %v409, %v407
    %v546 = vpack.c.b16 %v410, %v408
    %v547 = vpack.c.b16 %v413, %v411
    %v548 = vpack.c.b16 %v414, %v412
    %v549 = vpack.c.b16 %v417, %v415
    %v550 = vpack.c.b16 %v418, %v416
    %v551 = vpack.c.b16 %v421, %v419
    %v552 = vpack.c.b16 %v422, %v420
    %v553 = vpack.c.b16 %v425, %v423
    %v554 = vpack.c.b16 %v426, %v424
    %v555 = vpack.c.b16 %v429, %v427
    %v556 = vpack.c.b16 %v430, %v428
    %v557 = vpack.c.b16 %v433, %v431
    %v558 = vpack.c.b16 %v434, %v432
    %v559 = vpack.c.b16 %v437, %v435
    %v560 = vpack.c.b16 %v438, %v436
    %v561 = vpack.c.b16 %v441, %v439
    %v562 = vpack.c.b16 %v442, %v440
    %v563 = vpack.c.b16 %v445, %v443
    %v564 = vpack.c.b16 %v446, %v444
    %v565 = vpack.c.b16 %v449, %v447
    %v566 = vpack.c.b16 %v450, %v448
    %v567 = vpack.c.b16 %v453, %v451
    %v568 = vpack.c.b16 %v454, %v452
    %v569 = vpack.c.b16 %v457, %v455
    %v570 = vpack.c.b16 %v458, %v456
    %v571 = vpack.c.b16 %v461, %v459
    %v572 = vpack.c.b16 %v462, %v460
    %v573 = vpack.c.b16 %v465, %v463
    %v574 = vpack.c.b16 %v466, %v464
    %v575 = vpack.c.b16 %v469, %v467
    %v576 = vpack.c.b16 %v470, %v468
    %v577 = vpack.c.b16 %v473, %v471
    %v578 = vpack.c.b16 %v474, %v472
    %v579 = vpack.c.b16 %v477, %v475
    %v580 = vpack.c.b16 %v478, %v476
    %v581 = vpack.c.b16 %v481, %v479
    %v582 = vpack.c.b16 %v482, %v480
    %v583 = vpack.c.b16 %v485, %v483
    %v584 = vpack.c.b16 %v486, %v484
    %v585 = vpack.c.b16 %v489, %v487
    %v586 = vpack.c.b16 %v490, %v488
    %683 = vmatprep.subr.bf16.mxu0 %v506
    %684 = vmatpush1.bf16.msra.mxu0 %v505
    %685 = vmatprep.subr.bf16.mxu0 %v504
    %686 = vmatpush1.bf16.msra.mxu0 %v503
    %687 = vmatprep.subr.bf16.mxu0 %v502
    %688 = vmatpush1.bf16.msra.mxu0 %v501
    %689 = vmatprep.subr.bf16.mxu0 %v500
    %690 = vmatpush1.bf16.msra.mxu0 %v499
    %691 = vmatprep.subr.bf16.mxu0 %v498
    %692 = vmatpush1.bf16.msra.mxu0 %v497
    %693 = vmatprep.subr.bf16.mxu0 %v496
    %694 = vmatpush1.bf16.msra.mxu0 %v495
    %695 = vmatprep.subr.bf16.mxu0 %v494
    %696 = vmatpush1.bf16.msra.mxu0 %v493
    %697 = vmatprep.subr.bf16.mxu0 %v492
    %698 = vmatpush1.bf16.msra.mxu0 %v491
    %699 = vmatprep.subr.bf16.mxu0 %v522
    %700 = vmatpush2.bf16.msra.mxu0 %v521
    %701 = vmatprep.subr.bf16.mxu0 %v520
    %702 = vmatpush2.bf16.msra.mxu0 %v519
    %703 = vmatprep.subr.bf16.mxu0 %v518
    %704 = vmatpush2.bf16.msra.mxu0 %v517
    %705 = vmatprep.subr.bf16.mxu0 %v516
    %706 = vmatpush2.bf16.msra.mxu0 %v515
    %707 = vmatprep.subr.bf16.mxu0 %v514
    %708 = vmatpush2.bf16.msra.mxu0 %v513
    %709 = vmatprep.subr.bf16.mxu0 %v512
    %710 = vmatpush2.bf16.msra.mxu0 %v511
    %711 = vmatprep.subr.bf16.mxu0 %v510
    %712 = vmatpush2.bf16.msra.mxu0 %v509
    %713 = vmatprep.subr.bf16.mxu0 %v508
    %714 = vmatpush2.bf16.msra.mxu0 %v507
    %715 = vmatprep.mubr.bf16.mxu0 %v86
    %716 = vmatmul.mubr.bf16.gmra.mxu0 %v85
    %v717 = vpop.f32.mrf.mxu0
    %v718 = vadd.f32 %v201, %v717
    %v719 = vpop.f32.mrf.mxu0
    %v720 = vadd.f32 %v202, %v719
    %v721 = vpop.f32.mrf.mxu0
    %v722 = vpop.f32.mrf.mxu0
    %723 = vdwg.mxu0
    %724 = vmatprep.subr.bf16.mxu0 %v538
    %725 = vmatpush1.bf16.msra.mxu0 %v537
    %726 = vmatprep.subr.bf16.mxu0 %v536
    %727 = vmatpush1.bf16.msra.mxu0 %v535
    %728 = vmatprep.subr.bf16.mxu0 %v534
    %729 = vmatpush1.bf16.msra.mxu0 %v533
    %730 = vmatprep.subr.bf16.mxu0 %v532
    %731 = vmatpush1.bf16.msra.mxu0 %v531
    %732 = vmatprep.subr.bf16.mxu0 %v530
    %733 = vmatpush1.bf16.msra.mxu0 %v529
    %734 = vmatprep.subr.bf16.mxu0 %v528
    %735 = vmatpush1.bf16.msra.mxu0 %v527
    %736 = vmatprep.subr.bf16.mxu0 %v526
    %737 = vmatpush1.bf16.msra.mxu0 %v525
    %738 = vmatprep.subr.bf16.mxu0 %v524
    %739 = vmatpush1.bf16.msra.mxu0 %v523
    %740 = vmatprep.subr.bf16.mxu0 %v554
    %741 = vmatpush2.bf16.msra.mxu0 %v553
    %742 = vmatprep.subr.bf16.mxu0 %v552
    %743 = vmatpush2.bf16.msra.mxu0 %v551
    %744 = vmatprep.subr.bf16.mxu0 %v550
    %745 = vmatpush2.bf16.msra.mxu0 %v549
    %746 = vmatprep.subr.bf16.mxu0 %v548
    %747 = vmatpush2.bf16.msra.mxu0 %v547
    %748 = vmatprep.subr.bf16.mxu0 %v546
    %749 = vmatpush2.bf16.msra.mxu0 %v545
    %750 = vmatprep.subr.bf16.mxu0 %v544
    %751 = vmatpush2.bf16.msra.mxu0 %v543
    %752 = vmatprep.subr.bf16.mxu0 %v542
    %753 = vmatpush2.bf16.msra.mxu0 %v541
    %754 = vmatprep.subr.bf16.mxu0 %v540
    %755 = vmatpush2.bf16.msra.mxu0 %v539
    %756 = vmatprep.mubr.bf16.mxu0 %v88
    %757 = vmatmul.mubr.bf16.gmra.mxu0 %v87
    %v758 = vpop.f32.mrf.mxu0
    %v759 = vadd.f32 %v718, %v758
    %v760 = vpop.f32.mrf.mxu0
    %v761 = vadd.f32 %v720, %v760
    %v762 = vpop.f32.mrf.mxu0
    %v763 = vpop.f32.mrf.mxu0
    %764 = vdwg.mxu0
    %765 = vmatprep.subr.bf16.mxu0 %v570
    %766 = vmatpush1.bf16.msra.mxu0 %v569
    %767 = vmatprep.subr.bf16.mxu0 %v568
    %768 = vmatpush1.bf16.msra.mxu0 %v567
    %769 = vmatprep.subr.bf16.mxu0 %v566
    %770 = vmatpush1.bf16.msra.mxu0 %v565
    %771 = vmatprep.subr.bf16.mxu0 %v564
    %772 = vmatpush1.bf16.msra.mxu0 %v563
    %773 = vmatprep.subr.bf16.mxu0 %v562
    %774 = vmatpush1.bf16.msra.mxu0 %v561
    %775 = vmatprep.subr.bf16.mxu0 %v560
    %776 = vmatpush1.bf16.msra.mxu0 %v559
    %777 = vmatprep.subr.bf16.mxu0 %v558
    %778 = vmatpush1.bf16.msra.mxu0 %v557
    %779 = vmatprep.subr.bf16.mxu0 %v556
    %780 = vmatpush1.bf16.msra.mxu0 %v555
    %781 = vmatprep.subr.bf16.mxu0 %v586
    %782 = vmatpush2.bf16.msra.mxu0 %v585
    %783 = vmatprep.subr.bf16.mxu0 %v584
    %784 = vmatpush2.bf16.msra.mxu0 %v583
    %785 = vmatprep.subr.bf16.mxu0 %v582
    %786 = vmatpush2.bf16.msra.mxu0 %v581
    %787 = vmatprep.subr.bf16.mxu0 %v580
    %788 = vmatpush2.bf16.msra.mxu0 %v579
    %789 = vmatprep.subr.bf16.mxu0 %v578
    %790 = vmatpush2.bf16.msra.mxu0 %v577
    %791 = vmatprep.subr.bf16.mxu0 %v576
    %792 = vmatpush2.bf16.msra.mxu0 %v575
    %793 = vmatprep.subr.bf16.mxu0 %v574
    %794 = vmatpush2.bf16.msra.mxu0 %v573
    %795 = vmatprep.subr.bf16.mxu0 %v572
    %796 = vmatpush2.bf16.msra.mxu0 %v571
    %797 = vmatprep.mubr.bf16.mxu0 %v90
    %798 = vmatmul.mubr.bf16.gmra.mxu0 %v89
    %v799 = vpop.f32.mrf.mxu0
    %v800 = vadd.f32 %v759, %v799
    %v801 = vpop.f32.mrf.mxu0
    %v802 = vadd.f32 %v761, %v801
    %v803 = vpop.f32.mrf.mxu0
    %v804 = vpop.f32.mrf.mxu0
    %805 = vdwg.mxu0
    %v806 = vld [vmem:[%s3] sm:$0x3]
    %v808 = vlaneseq
    %v809 = vshrl.u32 %v808, 7
    %v810 = vsub.s32 0, %v809
    %v811 = vrot.slane %v806, %v810
    %v812 = vlaneseq
    %v813 = vshrl.u32 %v812, 7
    %v814 = vsub.s32 1, %v813
    %v815 = vrot.slane %v806, %v814
    %v818 = vadd.f32 %v800, %v811
    %v819 = vadd.f32 %v802, %v815
    %v820 = vmax.f32 %v818, 0.0
    %v821 = vmax.f32 %v819, 0.0
    %v822 = vpack.c.bf16 %v820, %v820
    %v823 = vpack.c.bf16 %v821, %v821
    %v824 = vld [vmem:[#allocation8] sm:$0xf]
    %v825 = vld [vmem:[#allocation8 + $0x4] sm:$0xf]
    %v826 = vld [vmem:[#allocation8 + $0x8] sm:$0xf]
    %v827 = vld [vmem:[#allocation8 + $0xc] sm:$0xf]
    %v828 = vld [vmem:[#allocation8 + $0x10] sm:$0xf]
    %v829 = vld [vmem:[#allocation8 + $0x14] sm:$0xf]
    %v830 = vld [vmem:[#allocation8 + $0x18] sm:$0xf]
    %v831 = vld [vmem:[#allocation8 + $0x1c] sm:$0xf]
    %v832 = vld [vmem:[#allocation8 + $0x20] sm:$0xf]
    %v833 = vld [vmem:[#allocation8 + $0x24] sm:$0xf]
    %v834 = vld [vmem:[#allocation8 + $0x28] sm:$0xf]
    %v835 = vld [vmem:[#allocation8 + $0x2c] sm:$0xf]
    %v836 = vld [vmem:[#allocation8 + $0x30] sm:$0xf]
    %v837 = vld [vmem:[#allocation8 + $0x34] sm:$0xf]
    %v838 = vld [vmem:[#allocation8 + $0x38] sm:$0xf]
    %v839 = vld [vmem:[#allocation8 + $0x3c] sm:$0xf]
    %v840 = vld [vmem:[#allocation8 + $0x40] sm:$0xf]
    %v841 = vld [vmem:[#allocation8 + $0x44] sm:$0xf]
    %v842 = vld [vmem:[#allocation8 + $0x48] sm:$0xf]
    %v843 = vld [vmem:[#allocation8 + $0x4c] sm:$0xf]
    %v844 = vld [vmem:[#allocation8 + $0x50] sm:$0xf]
    %v845 = vld [vmem:[#allocation8 + $0x54] sm:$0xf]
    %v846 = vld [vmem:[#allocation8 + $0x58] sm:$0xf]
    %v847 = vld [vmem:[#allocation8 + $0x5c] sm:$0xf]
    %v848 = vld [vmem:[#allocation8 + $0x60] sm:$0xf]
    %v849 = vld [vmem:[#allocation8 + $0x64] sm:$0xf]
    %v850 = vld [vmem:[#allocation8 + $0x68] sm:$0xf]
    %v851 = vld [vmem:[#allocation8 + $0x6c] sm:$0xf]
    %v852 = vld [vmem:[#allocation8 + $0x70] sm:$0xf]
    %v853 = vld [vmem:[#allocation8 + $0x74] sm:$0xf]
    %v854 = vld [vmem:[#allocation8 + $0x78] sm:$0xf]
    %v855 = vld [vmem:[#allocation8 + $0x7c] sm:$0xf]
    %v856 = vld [vmem:[%s6] sm:$0x1]
    %v858 = vlaneseq
    %v859 = vshrl.u32 %v858, 7
    %v860 = vsub.s32 0, %v859
    %v861 = vrot.slane %v856, %v860
    %v895 = vunpack.c.l.b16 %v824
    %v896 = vunpack.c.l.b16 %v825
    %v897 = vunpack.c.l.b16 %v826
    %v898 = vunpack.c.l.b16 %v827
    %v899 = vunpack.c.l.b16 %v828
    %v900 = vunpack.c.l.b16 %v829
    %v901 = vunpack.c.l.b16 %v830
    %v902 = vunpack.c.l.b16 %v831
    %v903 = vunpack.c.l.b16 %v832
    %v904 = vunpack.c.l.b16 %v833
    %v905 = vunpack.c.l.b16 %v834
    %v906 = vunpack.c.l.b16 %v835
    %v907 = vunpack.c.l.b16 %v836
    %v908 = vunpack.c.l.b16 %v837
    %v909 = vunpack.c.l.b16 %v838
    %v910 = vunpack.c.l.b16 %v839
    %v911 = vunpack.c.l.b16 %v840
    %v912 = vunpack.c.l.b16 %v841
    %v913 = vunpack.c.l.b16 %v842
    %v914 = vunpack.c.l.b16 %v843
    %v915 = vunpack.c.l.b16 %v844
    %v916 = vunpack.c.l.b16 %v845
    %v917 = vunpack.c.l.b16 %v846
    %v918 = vunpack.c.l.b16 %v847
    %v919 = vunpack.c.l.b16 %v848
    %v920 = vunpack.c.l.b16 %v849
    %v921 = vunpack.c.l.b16 %v850
    %v922 = vunpack.c.l.b16 %v851
    %v923 = vunpack.c.l.b16 %v852
    %v924 = vunpack.c.l.b16 %v853
    %v925 = vunpack.c.l.b16 %v854
    %v926 = vunpack.c.l.b16 %v855
    %v927 = vpack.c.b16 %v896, %v895
    %v928 = vpack.c.b16 %v898, %v897
    %v929 = vpack.c.b16 %v900, %v899
    %v930 = vpack.c.b16 %v902, %v901
    %v931 = vpack.c.b16 %v904, %v903
    %v932 = vpack.c.b16 %v906, %v905
    %v933 = vpack.c.b16 %v908, %v907
    %v934 = vpack.c.b16 %v910, %v909
    %v935 = vpack.c.b16 %v912, %v911
    %v936 = vpack.c.b16 %v914, %v913
    %v937 = vpack.c.b16 %v916, %v915
    %v938 = vpack.c.b16 %v918, %v917
    %v939 = vpack.c.b16 %v920, %v919
    %v940 = vpack.c.b16 %v922, %v921
    %v941 = vpack.c.b16 %v924, %v923
    %v942 = vpack.c.b16 %v926, %v925
    %959 = vmatprep.subr.bf16.mxu0 0
    %960 = vmatpush1.bf16.msra.mxu0 %v934
    %961 = vmatprep.subr.bf16.mxu0 0
    %962 = vmatpush1.bf16.msra.mxu0 %v933
    %963 = vmatprep.subr.bf16.mxu0 0
    %964 = vmatpush1.bf16.msra.mxu0 %v932
    %965 = vmatprep.subr.bf16.mxu0 0
    %966 = vmatpush1.bf16.msra.mxu0 %v931
    %967 = vmatprep.subr.bf16.mxu0 0
    %968 = vmatpush1.bf16.msra.mxu0 %v930
    %969 = vmatprep.subr.bf16.mxu0 0
    %970 = vmatpush1.bf16.msra.mxu0 %v929
    %971 = vmatprep.subr.bf16.mxu0 0
    %972 = vmatpush1.bf16.msra.mxu0 %v928
    %973 = vmatprep.subr.bf16.mxu0 0
    %974 = vmatpush1.bf16.msra.mxu0 %v927
    %975 = vmatprep.subr.bf16.mxu0 0
    %976 = vmatpush2.bf16.msra.mxu0 %v942
    %977 = vmatprep.subr.bf16.mxu0 0
    %978 = vmatpush2.bf16.msra.mxu0 %v941
    %979 = vmatprep.subr.bf16.mxu0 0
    %980 = vmatpush2.bf16.msra.mxu0 %v940
    %981 = vmatprep.subr.bf16.mxu0 0
    %982 = vmatpush2.bf16.msra.mxu0 %v939
    %983 = vmatprep.subr.bf16.mxu0 0
    %984 = vmatpush2.bf16.msra.mxu0 %v938
    %985 = vmatprep.subr.bf16.mxu0 0
    %986 = vmatpush2.bf16.msra.mxu0 %v937
    %987 = vmatprep.subr.bf16.mxu0 0
    %988 = vmatpush2.bf16.msra.mxu0 %v936
    %989 = vmatprep.subr.bf16.mxu0 0
    %990 = vmatpush2.bf16.msra.mxu0 %v935
    %991 = vmatprep.mubr.bf16.mxu0 %v823
    %992 = vmatmul.mubr.bf16.gmra.mxu0 %v822
    %v993 = vpop.f32.mrf.mxu0
    %v994 = vadd.f32 %v861, %v993
    %v995 = vpop.f32.mrf.mxu0
    %v996 = vpop.f32.mrf.mxu0
    %v997 = vpop.f32.mrf.mxu0
    %998 = vdwg.mxu0
    %999 = vst [vmem:[#allocation10] sm:$0xff] %v994
    // Predicated region
    $region46: #{tpu_custom_call.1} parent=1 // pred_check
      _
    $region47: #{tpu_custom_call.1} parent=1 // pred_check_branch
      %1001 = sbr.rel (0) target = $region49
    $region48: #{tpu_custom_call.1} parent=1 // pred_region
      %s1003 = ssub.s32 128, 128
      %1004 = vsyncadd [#allocation4], %s1003
      %s1006 = sshll.u32 [#allocation10], 4
      %s1007 = int_to_ptr.vmem [resolvable:$true] %s1006
      %1009 = dma.vmem_to_hbm [thread:$0]  %s1007, 128, %s7, [#allocation4]
    $region49: #{tpu_custom_call.1} parent=1 // pred_fallthru
      _
    // Predicated region
    $region50: #{tpu_custom_call.1} parent=1 // pred_check
      _
    $region51: #{tpu_custom_call.1} parent=1 // pred_check_branch
      %1011 = sbr.rel (0) target = $region53
    $region52: #{tpu_custom_call.1} parent=1 // pred_region
      %1012 = dma.done [#allocation4], 128
    $region53: #{tpu_custom_call.1} parent=1 // pred_fallthru
      _
    %1013 = vsyncpa [#allocation3], 1
    %1014 = vsyncpa [#allocation6], 1
    %1015 = vsyncpa [#allocation9], 1
    %1016 = vsyncpa [#allocation4], 1

</llo_original>
